<compile_context>
chip_gen: v5e
topology: v5e:2x2
jax: 0.10.0
libtpu: 0.0.40
codegen_flags: <defaults>
</compile_context>

<pallas_src>
import jax
import jax.numpy as jnp
from jax.experimental import pallas as pl
from jax.experimental.pallas import tpu as pltpu

_B_W = 10          # beta width (SMPL shape coefficients)
_D_W = 1           # depth width
_PAYLOAD = _D_W + _B_W


def _delta_add_kernel(depth_ref, delta_d_ref, beta_ref, delta_b_ref,
                      out_depth_ref, out_beta_ref):
    # Two unpadded elementwise adds on the current row tile.
    out_depth_ref[...] = depth_ref[...] + delta_d_ref[...]
    out_beta_ref[...] = delta_b_ref[...] + beta_ref[...]


def delta_depth_beta(depth, beta, delta_d, delta_b, *, tile_bs=1024):
    """Pallas implementation of DeltaDepthBeta.forward.

    depth:   (bs, 1)      float32
    beta:    (bs, 1, 10)  float32
    delta_d: (bs, 1)      float32  (parameter)
    delta_b: (bs, 1, 10)  float32  (parameter)
    returns: (depth + delta_d, delta_b + beta)  with original shapes.
    """
    bs = depth.shape[0]

    # Squeeze the size-1 middle dim; pure metadata reshape, no data movement.
    beta_2d = beta.reshape(bs, _B_W)
    delta_b_2d = delta_b.reshape(bs, _B_W)

    # Row grid: full block for small bs, TILE_BS-row tiles (multiple of 8)
    # for large bs so VMEM stays bounded and v7x's 2 TCs can split the grid.
    if bs <= tile_bs:
        tb = bs
        grid = (1,)
    else:
        tb = tile_bs
        grid = (pl.cdiv(bs, tb),)

    depth_spec = pl.BlockSpec((tb, _D_W), lambda i: (i, 0))
    beta_spec = pl.BlockSpec((tb, _B_W), lambda i: (i, 0))

    # Advisory cost hint: trivially cheap custom call.
    bytes_accessed = 3 * _PAYLOAD * bs * depth.dtype.itemsize
    cost = pl.CostEstimate(flops=_PAYLOAD * bs,
                           transcendentals=0,
                           bytes_accessed=bytes_accessed)

    out_depth, out_beta_2d = pl.pallas_call(
        _delta_add_kernel,
        grid=grid,
        in_specs=[depth_spec, depth_spec, beta_spec, beta_spec],
        out_specs=[depth_spec, beta_spec],
        out_shape=(
            jax.ShapeDtypeStruct((bs, _D_W), depth.dtype),
            jax.ShapeDtypeStruct((bs, _B_W), beta.dtype),
        ),
        compiler_params=pltpu.CompilerParams(
            dimension_semantics=("parallel",)),
        cost_estimate=cost,
    )(depth, delta_d, beta_2d, delta_b_2d)

    return out_depth, out_beta_2d.reshape(bs, 1, _B_W)


if __name__ == "__main__":
    bs = 2

    key = jax.random.PRNGKey(0)
    k_depth, k_beta, k_dd, k_db = jax.random.split(key, 4)

    # Example inputs (depth per-sample scalar, beta SMPL shape coeffs).
    depth = jax.random.normal(k_depth, (bs, 1), dtype=jnp.float32)
    beta = jax.random.normal(k_beta, (bs, 1, 10), dtype=jnp.float32)

    # Parameters: PyTorch initializes them to zeros; use small non-zero values
    # so the kernel's adds are actually exercised.
    delta_d = 0.01 * jax.random.normal(k_dd, (bs, 1), dtype=jnp.float32)
    delta_b = 0.01 * jax.random.normal(k_db, (bs, 1, 10), dtype=jnp.float32)

    out_depth, out_beta = delta_depth_beta(depth, beta, delta_d, delta_b)
    jax.block_until_ready((out_depth, out_beta))

    # Reference (plain JAX) check of exact forward semantics.
    ref_depth = depth + delta_d
    ref_beta = delta_b + beta
    assert out_depth.shape == (bs, 1) and out_depth.dtype == jnp.float32
    assert out_beta.shape == (bs, 1, 10) and out_beta.dtype == jnp.float32
    assert jnp.allclose(out_depth, ref_depth)
    assert jnp.allclose(out_beta, ref_beta)

    print("KERNEL_OK")
</pallas_src>

<mosaic_0001>
module attributes {stable_mosaic.version = 11 : i64} {
  func.func @_delta_add_kernel(%arg0: i32, %arg1: memref<2x1xf32, #tpu.memory_space<vmem>>, %arg2: memref<2x1xf32, #tpu.memory_space<vmem>>, %arg3: memref<2x10xf32, #tpu.memory_space<vmem>>, %arg4: memref<2x10xf32, #tpu.memory_space<vmem>>, %arg5: memref<2x1xf32, #tpu.memory_space<vmem>>, %arg6: memref<2x10xf32, #tpu.memory_space<vmem>>) attributes {dimension_semantics = [#tpu.dimension_semantics<parallel>], iteration_bounds = array<i64: 1>, scalar_prefetch = 0 : i64, scratch_operands = 0 : i64, tpu.core_type = #tpu.core_type<tc>, window_params = [{transform_indices = @transform_0, window_bounds = array<i64: 2, 1>}, {transform_indices = @transform_1, window_bounds = array<i64: 2, 1>}, {transform_indices = @transform_2, window_bounds = array<i64: 2, 10>}, {transform_indices = @transform_3, window_bounds = array<i64: 2, 10>}, {transform_indices = @transform_4, window_bounds = array<i64: 2, 1>}, {transform_indices = @transform_5, window_bounds = array<i64: 2, 10>}]} {
    %c0 = arith.constant 0 : index
    %c0_0 = arith.constant 0 : index
    %0 = vector.load %arg1[%c0, %c0_0] : memref<2x1xf32, #tpu.memory_space<vmem>>, vector<2x1xf32>
    %c0_1 = arith.constant 0 : index
    %c0_2 = arith.constant 0 : index
    %1 = vector.load %arg2[%c0_1, %c0_2] : memref<2x1xf32, #tpu.memory_space<vmem>>, vector<2x1xf32>
    %2 = arith.addf %0, %1 : vector<2x1xf32>
    %c0_3 = arith.constant 0 : index
    %c0_4 = arith.constant 0 : index
    %3 = vector.load %arg5[%c0_3, %c0_4] : memref<2x1xf32, #tpu.memory_space<vmem>>, vector<2x1xf32>
    tpu.vector_store %arg5[%c0_3, %c0_4], %2 {strides = array<i32>} : memref<2x1xf32, #tpu.memory_space<vmem>>, vector<2x1xf32>,
    %c0_5 = arith.constant 0 : index
    %c0_6 = arith.constant 0 : index
    %4 = vector.load %arg4[%c0_5, %c0_6] : memref<2x10xf32, #tpu.memory_space<vmem>>, vector<2x10xf32>
    %c0_7 = arith.constant 0 : index
    %c0_8 = arith.constant 0 : index
    %5 = vector.load %arg3[%c0_7, %c0_8] : memref<2x10xf32, #tpu.memory_space<vmem>>, vector<2x10xf32>
    %6 = arith.addf %4, %5 : vector<2x10xf32>
    %c0_9 = arith.constant 0 : index
    %c0_10 = arith.constant 0 : index
    %7 = vector.load %arg6[%c0_9, %c0_10] : memref<2x10xf32, #tpu.memory_space<vmem>>, vector<2x10xf32>
    tpu.vector_store %arg6[%c0_9, %c0_10], %6 {strides = array<i32>} : memref<2x10xf32, #tpu.memory_space<vmem>>, vector<2x10xf32>,
    return
  }
  func.func @transform_0(%arg0: i32) -> (i32, i32) {
    %c0_i32 = arith.constant 0 : i32
    %c0_i32_0 = arith.constant 0 : i32
    return %arg0, %c0_i32 : i32, i32
  }
  func.func @transform_1(%arg0: i32) -> (i32, i32) {
    %c0_i32 = arith.constant 0 : i32
    %c0_i32_0 = arith.constant 0 : i32
    return %arg0, %c0_i32 : i32, i32
  }
  func.func @transform_2(%arg0: i32) -> (i32, i32) {
    %c0_i32 = arith.constant 0 : i32
    %c0_i32_0 = arith.constant 0 : i32
    return %arg0, %c0_i32 : i32, i32
  }
  func.func @transform_3(%arg0: i32) -> (i32, i32) {
    %c0_i32 = arith.constant 0 : i32
    %c0_i32_0 = arith.constant 0 : i32
    return %arg0, %c0_i32 : i32, i32
  }
  func.func @transform_4(%arg0: i32) -> (i32, i32) {
    %c0_i32 = arith.constant 0 : i32
    %c0_i32_0 = arith.constant 0 : i32
    return %arg0, %c0_i32 : i32, i32
  }
  func.func @transform_5(%arg0: i32) -> (i32, i32) {
    %c0_i32 = arith.constant 0 : i32
    %c0_i32_0 = arith.constant 0 : i32
    return %arg0, %c0_i32 : i32, i32
  }
}

</mosaic_0001>

<llo_original>
// kernel: tpu_custom_call.1
$region0: #{tpu_custom_call.1}
  #allocation0 [shape = 'u32[]', space=smem, size = 0x4, offset = 0x4, fixed_abs, tag = 'smem constant byte address 0x4 - core index']
  #allocation1 [shape = 'u32[72,128]{1,0:T(1,128)}', space=vmem, size = 0x9000, scoped, tag = 'internal scratch']
  %s0 = inlined_call_operand.vmem [shape: f32[2,1], index: 0, kind: input, shape index: {}]
  %s1 = inlined_call_operand.vmem [shape: f32[2,1], index: 1, kind: input, shape index: {}]
  %s2 = inlined_call_operand.vmem [shape: f32[2,10], index: 2, kind: input, shape index: {}]
  %s3 = inlined_call_operand.vmem [shape: f32[2,10], index: 3, kind: input, shape index: {}]
  %s4 = inlined_call_operand.vmem [shape: f32[2,1], index: 4, kind: output, shape index: {0}]
  %s5 = inlined_call_operand.hbm [shape: f32[2,10], index: 5, kind: output, shape index: {1}]
  %6 = xla_tuple %s4, %s5
  %s7 = sld [smem:[#allocation0]]
  $region34: #{tpu_custom_call.1} parent=0
    _
  %s9 = ssub.s32 1, %s7
  %s10 = scalar_select 0, %s9, %s7
  $region1: #{tpu_custom_call.1} parent=0
    #allocation2 [shape = 'u8[1024]{0}', space=vmem, size = 0x400, scoped, tag = 'output window, operand 1, single buffered']
    #allocation3 [shape = 's32[1]{0}', space=sflag, size = 0x4, scoped, tag = 'scoped memory for tpu_custom_call.1']
    %11 = vsyncpa [#allocation3], 0
    // Predicated region
    $region2: #{tpu_custom_call.1} parent=1 // pred_check
      _
    $region3: #{tpu_custom_call.1} parent=1 // pred_check_branch
      %13 = sbr.rel (0) target = $region5
    $region4: #{tpu_custom_call.1} parent=1 // pred_region
      _
    $region5: #{tpu_custom_call.1} parent=1 // pred_fallthru
      _
    // Predicated region
    $region6: #{tpu_custom_call.1} parent=1 // pred_check
      _
    $region7: #{tpu_custom_call.1} parent=1 // pred_check_branch
      %15 = sbr.rel (0) target = $region9
    $region8: #{tpu_custom_call.1} parent=1 // pred_region
      _
    $region9: #{tpu_custom_call.1} parent=1 // pred_fallthru
      _
    // Predicated region
    $region10: #{tpu_custom_call.1} parent=1 // pred_check
      _
    $region11: #{tpu_custom_call.1} parent=1 // pred_check_branch
      %17 = sbr.rel (0) target = $region13
    $region12: #{tpu_custom_call.1} parent=1 // pred_region
      _
    $region13: #{tpu_custom_call.1} parent=1 // pred_fallthru
      _
    // Predicated region
    $region14: #{tpu_custom_call.1} parent=1 // pred_check
      _
    $region15: #{tpu_custom_call.1} parent=1 // pred_check_branch
      %19 = sbr.rel (0) target = $region17
    $region16: #{tpu_custom_call.1} parent=1 // pred_region
      _
    $region17: #{tpu_custom_call.1} parent=1 // pred_fallthru
      _
    %v20 = vld [vmem:[%s0] sm:$0x3]
    %v21 = vld [vmem:[%s1] sm:$0x3]
    %v22 = vadd.f32 %v20, %v21
    %vm23 = vcmask 1024
    %24 = vst.msk [vmem:[%s4] sm:$0x3] %vm23, %v22
    %v25 = vld [vmem:[%s3] sm:$0x3]
    %v26 = vld [vmem:[%s2] sm:$0x3]
    %v27 = vadd.f32 %v25, %v26
    %vm28 = vcmask 74752
    %29 = vst.msk [vmem:[#allocation2] sm:$0x3] %vm28, %v27
    // Predicated region
    $region18: #{tpu_custom_call.1} parent=1 // pred_check
      _
    $region19: #{tpu_custom_call.1} parent=1 // pred_check_branch
      %31 = sbr.rel (0) target = $region21
    $region20: #{tpu_custom_call.1} parent=1 // pred_region
      _
    $region21: #{tpu_custom_call.1} parent=1 // pred_fallthru
      _
    // Predicated region
    $region22: #{tpu_custom_call.1} parent=1 // pred_check
      _
    $region23: #{tpu_custom_call.1} parent=1 // pred_check_branch
      %33 = sbr.rel (0) target = $region25
    $region24: #{tpu_custom_call.1} parent=1 // pred_region
      %35 = vsyncadd [#allocation3], 0
      %s37 = sshll.u32 [#allocation2], 4
      %s38 = int_to_ptr.vmem [resolvable:$true] %s37
      %s39 = sshll.u32 %s5, 4
      %s40 = int_to_ptr.hbm [resolvable:$true] %s39
      %42 = dma.vmem_to_hbm [thread:$0]  %s38, 32, %s40, [#allocation3]
    $region25: #{tpu_custom_call.1} parent=1 // pred_fallthru
      _
    // Predicated region
    $region26: #{tpu_custom_call.1} parent=1 // pred_check
      _
    $region27: #{tpu_custom_call.1} parent=1 // pred_check_branch
      %44 = sbr.rel (0) target = $region29
    $region28: #{tpu_custom_call.1} parent=1 // pred_region
      _
    $region29: #{tpu_custom_call.1} parent=1 // pred_fallthru
      _
    // Predicated region
    $region30: #{tpu_custom_call.1} parent=1 // pred_check
      _
    $region31: #{tpu_custom_call.1} parent=1 // pred_check_branch
      %46 = sbr.rel (0) target = $region33
    $region32: #{tpu_custom_call.1} parent=1 // pred_region
      %48 = dma.done [#allocation3], 32
    $region33: #{tpu_custom_call.1} parent=1 // pred_fallthru
      _
    %49 = vsyncpa [#allocation3], 1

</llo_original>
